<compile_context>
chip_gen: v6e
topology: v6e:2x2x1
jax: 0.10.0
libtpu: 0.0.40
codegen_flags: <defaults>
</compile_context>

<pallas_src>
import functools
import math

import jax
import jax.numpy as jnp
import numpy as np
from jax import lax
from jax.experimental import pallas as pl
from jax.experimental.pallas import tpu as pltpu

_BN_EPS = 1e-5
_LANE = 128


def _cdiv(a, b):
    return -(-a // b)


def _round_up(a, m):
    return _cdiv(a, m) * m


# --------------------------------------------------------------- vmem budget --
_VMEM_CACHE = []


def _vmem_limit():
    """Per-generation scoped-VMEM budget: 96 MiB on v5e/v6e, 32 MiB on v7x."""
    if _VMEM_CACHE:
        return _VMEM_CACHE[0]
    limit = 32 * 1024 * 1024
    get_info = getattr(pltpu, "get_tpu_info", None)
    if get_info is not None:
        try:
            cap = int(getattr(get_info(), "vmem_capacity_bytes", 0) or 0)
            if cap >= 100 * 1024 * 1024:          # v5e / v6e: 128 MiB physical
                limit = 96 * 1024 * 1024
            elif cap > 0:                          # v7x: 64 MiB physical
                limit = min(limit, cap // 2)
        except Exception:
            pass
    _VMEM_CACHE.append(limit)
    return limit


# ------------------------------------------------------------- tile choosers --
def _choose_mm_tiles(M, lhs_ks, cout_p, out_bytes, budget, *, tn_max=512, min_steps=4):
    """Row / Cout tile sizes for the 1x1-conv matmul kernels (balanced blocks)."""
    n_ct = max(1, _cdiv(cout_p, tn_max))
    tn = _round_up(_cdiv(cout_p, n_ct), _LANE)
    per_row = 2 * 2 * sum(lhs_ks) + 2 * out_bytes * tn          # bf16 lhs + out, double-buffered
    fixed = 2 * 2 * sum(lhs_ks) * tn + 2 * 4 * tn               # weights + bias, double-buffered
    avail = max((budget // 2) - fixed, 8 * per_row)
    tm = max(8, min(avail // per_row, 2048))
    steps = max(min_steps, _cdiv(M, tm))                        # balanced, >= min_steps blocks
    tm = max(8, _round_up(_cdiv(M, steps), 8))
    return int(tm), int(tn)


def _choose_conv_rows(N, Ho, Wph, C, cout_p, s, budget):
    """Output-row tile for the 3x3 conv: TR rows per step, TR*Wph % 8 == 0."""
    q = 8 // math.gcd(Wph, 8)                # TR quantum so the row block is sublane aligned
    halo_rows = (2 // s) + 1                 # phase-grid rows covering the tap halo
    per_row = (2 * 2 * s * s * Wph * C * 2   # main + halo input blocks, double-buffered bf16
               + 2 * 2 * Wph * cout_p        # bf16 output block, double-buffered
               + 4 * Wph * cout_p)           # f32 accumulator scratch
    fixed = 2 * 2 * 9 * C * cout_p + 2 * 4 * cout_p
    avail = max((budget // 2) - fixed, q * per_row)
    tr = max(q, min(avail // per_row, _round_up(Ho, q)))
    tr = max((tr // q) * q, _round_up(halo_rows, q))
    min_steps = max(1, _cdiv(4, max(N, 1)))  # aim for >= 4 total parallel steps
    steps = max(_cdiv(Ho, tr), min_steps)
    steps = min(steps, max(1, _cdiv(Ho, q)))
    tr = max(_round_up(_cdiv(Ho, steps), q), _round_up(halo_rows, q))
    return int(tr), halo_rows


# -------------------------------------------------------------------- kernels --
def _mm_bias_act_kernel(x_ref, w_ref, b_ref, o_ref, *, relu):
    # 1x1 conv as matmul (bf16 operands, f32 accumulate) + folded-BN bias (+ReLU)
    y = jnp.dot(x_ref[...], w_ref[...], preferred_element_type=jnp.float32)
    y = y + b_ref[...]
    if relu:
        y = jnp.maximum(y, 0.0)
    o_ref[...] = y.astype(o_ref.dtype)


def _mm_add_relu_kernel(x_ref, w_ref, r_ref, b_ref, o_ref):
    # branch2c matmul + identity residual + ReLU
    y = jnp.dot(x_ref[...], w_ref[...], preferred_element_type=jnp.float32)
    y = y + r_ref[...].astype(jnp.float32) + b_ref[...]
    o_ref[...] = jnp.maximum(y, 0.0).astype(o_ref.dtype)


def _mm2_bias_relu_kernel(x_ref, w_ref, r_ref, wr_ref, b_ref, o_ref):
    # branch2c matmul + fused shortcut 1x1 projection + ReLU (one f32 accumulator)
    y = jnp.dot(x_ref[...], w_ref[...], preferred_element_type=jnp.float32)
    y = y + jnp.dot(r_ref[...], wr_ref[...], preferred_element_type=jnp.float32)
    y = y + b_ref[...]
    o_ref[...] = jnp.maximum(y, 0.0).astype(o_ref.dtype)


def _conv3x3_bn_relu_kernel(xm_ref, xh_ref, w_ref, b_ref, o_ref, acc_ref, *,
                            stride, Wph, TM):
    # 3x3 conv as 9 accumulated matmuls over contiguous row windows of the
    # flattened phase grids (no im2col).  xm_ref holds the TM rows of this row
    # block; xh_ref holds the next row block and supplies the +halo rows.
    s = stride
    # first tap (kh=0, kw=0) always has offset 0: initialise the accumulator.
    acc_ref[...] = jnp.dot(xm_ref[0, 0, 0:TM, :], w_ref[0, 0],
                           preferred_element_type=jnp.float32)
    for kh in range(3):
        for kw in range(3):
            if kh == 0 and kw == 0:
                continue
            p = (kh % s) * s + (kw % s)
            off = (kh // s) * Wph + (kw // s)
            w_tap = w_ref[kh, kw]                                # (C, Coutp) bf16
            acc_ref[0:TM - off, :] += jnp.dot(
                xm_ref[0, p, off:TM, :], w_tap,
                preferred_element_type=jnp.float32)
            if off:
                acc_ref[TM - off:TM, :] += jnp.dot(
                    xh_ref[0, p, 0:off, :], w_tap,
                    preferred_element_type=jnp.float32)
    o_ref[0] = jnp.maximum(acc_ref[...] + b_ref[...], 0.0).astype(o_ref.dtype)


# ------------------------------------------------------------------- wrappers --
def matmul_bias_act(x2d, w2d, bias, *, relu, out_dtype=jnp.bfloat16, vmem_limit):
    """relu?((x2d @ w2d) + bias); tiled over (rows, Cout), lane-dense output."""
    M, K = x2d.shape
    cout_p = w2d.shape[1]
    tm, tn = _choose_mm_tiles(M, [K], cout_p, np.dtype(out_dtype).itemsize, vmem_limit)
    grid = (_cdiv(M, tm), _cdiv(cout_p, tn))
    return pl.pallas_call(
        functools.partial(_mm_bias_act_kernel, relu=relu),
        out_shape=jax.ShapeDtypeStruct((M, cout_p), out_dtype),
        grid=grid,
        in_specs=[
            pl.BlockSpec((tm, K), lambda i, j: (i, 0)),
            pl.BlockSpec((K, tn), lambda i, j: (0, j)),
            pl.BlockSpec((1, tn), lambda i, j: (0, j)),
        ],
        out_specs=pl.BlockSpec((tm, tn), lambda i, j: (i, j)),
        compiler_params=pltpu.CompilerParams(
            dimension_semantics=("parallel", "parallel"),
            vmem_limit_bytes=vmem_limit),
    )(x2d.astype(jnp.bfloat16), w2d.astype(jnp.bfloat16),
      bias.reshape(1, cout_p).astype(jnp.float32))


def matmul_residual_relu(x2d, w2d, bias, res2d, res_w=None, *,
                         out_dtype=jnp.float32, vmem_limit):
    """relu(x2d @ w2d + bias + (res2d @ res_w if res_w is not None else res2d))."""
    M, K = x2d.shape
    cout_p = w2d.shape[1]
    bias2 = bias.reshape(1, cout_p).astype(jnp.float32)
    out_b = np.dtype(out_dtype).itemsize
    if res_w is None:
        assert res2d.shape[1] == cout_p
        tm, tn = _choose_mm_tiles(M, [K, cout_p], cout_p, out_b, vmem_limit)
        grid = (_cdiv(M, tm), _cdiv(cout_p, tn))
        kernel = _mm_add_relu_kernel
        in_specs = [
            pl.BlockSpec((tm, K), lambda i, j: (i, 0)),
            pl.BlockSpec((K, tn), lambda i, j: (0, j)),
            pl.BlockSpec((tm, tn), lambda i, j: (i, j)),
            pl.BlockSpec((1, tn), lambda i, j: (0, j)),
        ]
        args = (x2d.astype(jnp.bfloat16), w2d.astype(jnp.bfloat16),
                res2d.astype(jnp.bfloat16), bias2)
    else:
        Kr = res2d.shape[1]
        tm, tn = _choose_mm_tiles(M, [K, Kr], cout_p, out_b, vmem_limit)
        grid = (_cdiv(M, tm), _cdiv(cout_p, tn))
        kernel = _mm2_bias_relu_kernel
        in_specs = [
            pl.BlockSpec((tm, K), lambda i, j: (i, 0)),
            pl.BlockSpec((K, tn), lambda i, j: (0, j)),
            pl.BlockSpec((tm, Kr), lambda i, j: (i, 0)),
            pl.BlockSpec((Kr, tn), lambda i, j: (0, j)),
            pl.BlockSpec((1, tn), lambda i, j: (0, j)),
        ]
        args = (x2d.astype(jnp.bfloat16), w2d.astype(jnp.bfloat16),
                res2d.astype(jnp.bfloat16), res_w.astype(jnp.bfloat16), bias2)
    return pl.pallas_call(
        kernel,
        out_shape=jax.ShapeDtypeStruct((M, cout_p), out_dtype),
        grid=grid,
        in_specs=in_specs,
        out_specs=pl.BlockSpec((tm, tn), lambda i, j: (i, j)),
        compiler_params=pltpu.CompilerParams(
            dimension_semantics=("parallel", "parallel"),
            vmem_limit_bytes=vmem_limit),
    )(*args)


def conv3x3_bn_relu(x_nhwc, w_hwio, bias, stride, *, vmem_limit):
    """3x3 conv (pad=1) + folded-BN bias + ReLU, tiled over (batch, output rows)."""
    N, H, W, C = x_nhwc.shape
    cout_p = w_hwio.shape[-1]
    s = int(stride)
    Ho = (H - 1) // s + 1
    Wo = (W - 1) // s + 1
    ew = (-(W + 2)) % s
    Wp = W + 2 + ew
    Wph = Wp // s
    assert Wph >= Wo + (2 // s) and Wph >= 2, "unexpected 3x3 conv geometry"

    tr, halo_rows = _choose_conv_rows(N, Ho, Wph, C, cout_p, s, vmem_limit)
    nblk = _cdiv(Ho, tr)
    TM = tr * Wph
    max_off = (2 // s) * Wph + (2 // s)
    assert TM % 8 == 0 and TM > max_off, (TM, max_off)

    # Pad so every main row-block is fully in bounds and the halo rows used by
    # the last block land on genuine zero padding.
    Hph = nblk * tr + halo_rows
    Hp = s * Hph
    eh = Hp - (H + 2)
    assert eh >= 0
    R = Hph * Wph
    assert R >= nblk * TM + max_off

    xp = jnp.pad(x_nhwc.astype(jnp.bfloat16),
                 ((0, 0), (1, 1 + eh), (1, 1 + ew), (0, 0)))
    if s == 1:
        phases = xp.reshape(N, 1, R, C)            # stride 1: pure reshape, no extra copy
    else:
        phases = jnp.stack(
            [xp[:, a::s, b::s, :] for a in range(s) for b in range(s)],
            axis=1).reshape(N, s * s, R, C)

    M_out = Ho * Wph
    out = pl.pallas_call(
        functools.partial(_conv3x3_bn_relu_kernel, stride=s, Wph=Wph, TM=TM),
        out_shape=jax.ShapeDtypeStruct((N, M_out, cout_p), jnp.bfloat16),
        grid=(N, nblk),
        in_specs=[
            pl.BlockSpec((1, s * s, TM, C), lambda n, i: (n, 0, i, 0)),       # this row block
            pl.BlockSpec((1, s * s, TM, C), lambda n, i: (n, 0, i + 1, 0)),   # halo rows
            pl.BlockSpec((3, 3, C, cout_p), lambda n, i: (0, 0, 0, 0)),
            pl.BlockSpec((1, cout_p), lambda n, i: (0, 0)),
        ],
        out_specs=pl.BlockSpec((1, TM, cout_p), lambda n, i: (n, i, 0)),
        scratch_shapes=[pltpu.VMEM((TM, cout_p), jnp.float32)],
        compiler_params=pltpu.CompilerParams(
            dimension_semantics=("parallel", "parallel"),
            vmem_limit_bytes=vmem_limit),
    )(phases, phases, w_hwio.astype(jnp.bfloat16),
      bias.reshape(1, cout_p).astype(jnp.float32))

    # TODO(synk): fold this junk-column slice into the branch2c matmul kernel to
    # save one full bf16 activation pass (matters most on v5e).
    out = out.reshape(N, Ho, Wph, cout_p)[:, :, :Wo, :]
    return out                                                  # (N, Ho, Wo, cout_p) bf16


# ------------------------------------------------------------------------ glue --
def _pad_last(a, to):
    pad = to - a.shape[-1]
    if pad == 0:
        return a
    cfg = [(0, 0)] * (a.ndim - 1) + [(0, pad)]
    return jnp.pad(a, cfg)


def _pad_axis(a, to, axis):
    pad = to - a.shape[axis]
    if pad == 0:
        return a
    cfg = [(0, 0)] * a.ndim
    cfg[axis] = (0, pad)
    return jnp.pad(a, cfg)


def _avgpool2x2_ceil(x):
    # AvgPool2d(2, 2, 0, ceil_mode=True): edge windows divide by #valid elements.
    N, H, W, C = x.shape
    Ho, Wo = _cdiv(H, 2), _cdiv(W, 2)
    xp = jnp.pad(x, ((0, 0), (0, 2 * Ho - H), (0, 2 * Wo - W), (0, 0)))
    ssum = xp.reshape(N, Ho, 2, Wo, 2, C).sum(axis=(2, 4))
    cnt_h = jnp.minimum(H - 2 * jnp.arange(Ho), 2).astype(x.dtype)
    cnt_w = jnp.minimum(W - 2 * jnp.arange(Wo), 2).astype(x.dtype)
    return ssum / (cnt_h[:, None] * cnt_w[None, :])[None, :, :, None]


# -------------------------------------------------------------- BottleNeck fwd --
def bottleneck_forward(x_nchw, params, stride, shortcut, variant='b'):
    vmem_limit = _vmem_limit()
    x = jnp.transpose(x_nchw, (0, 2, 3, 1)).astype(jnp.float32)   # NCHW -> NHWC
    N, H, W, Cin = x.shape
    s1, s2 = (stride, 1) if variant == 'a' else (1, stride)
    x_bf = x.astype(jnp.bfloat16)

    pa, pb, pc = params['branch2a'], params['branch2b'], params['branch2c']
    width = pa['w'].shape[-1]
    cexp = pc['w'].shape[-1]
    width_p = _round_up(width, _LANE)      # lane-dense intermediate channels
    cexp_p = _round_up(cexp, _LANE)

    # branch2a: 1x1 conv (stride s1) + folded BN + ReLU
    xa = x_bf if s1 == 1 else x_bf[:, ::s1, ::s1, :]
    Ha, Wa = xa.shape[1], xa.shape[2]
    wa = _pad_last(pa['w'].reshape(Cin, width) * pa['scale'][None, :], width_p)
    ba = _pad_last(pa['bias'], width_p)
    out_a = matmul_bias_act(xa.reshape(-1, Cin), wa, ba, relu=True,
                            vmem_limit=vmem_limit)
    out_a = out_a.reshape(N, Ha, Wa, width_p)

    # branch2b: 3x3 conv (stride s2, pad 1) + folded BN + ReLU (no im2col)
    wb = pb['w'] * pb['scale'][None, None, None, :]
    wb = _pad_last(_pad_axis(wb, width_p, axis=2), width_p)
    bb = _pad_last(pb['bias'], width_p)
    out_b = conv3x3_bn_relu(out_a, wb, bb, s2, vmem_limit=vmem_limit)
    Ho, Wo = out_b.shape[1], out_b.shape[2]
    out_b2d = out_b.reshape(-1, width_p)

    # branch2c (1x1 + folded BN) fused with the shortcut branch + add + ReLU
    wc = _pad_last(_pad_axis(pc['w'].reshape(width, cexp) * pc['scale'][None, :],
                             width_p, axis=0), cexp_p)
    bc = _pad_last(pc['bias'], cexp_p)
    if shortcut:
        assert stride == 1 and Cin == cexp, (
            "identity shortcut requires matching spatial size and channel count")
        res = x_bf.reshape(-1, Cin)
        if cexp_p != cexp:                         # only for toy channel counts
            res = jnp.pad(res, ((0, 0), (0, cexp_p - cexp)))
        out2d = matmul_residual_relu(out_b2d, wc, bc, res, None,
                                     vmem_limit=vmem_limit)
    else:
        ps = params['short']
        ws = _pad_last(ps['w'].reshape(Cin, cexp) * ps['scale'][None, :], cexp_p)
        bs = _pad_last(ps['bias'], cexp_p)
        if variant == 'd' and stride == 2:
            xs = _avgpool2x2_ceil(x).astype(jnp.bfloat16)
        elif stride == 1:
            xs = x_bf
        else:
            xs = x_bf[:, ::stride, ::stride, :]
        out2d = matmul_residual_relu(out_b2d, wc, bc + bs, xs.reshape(-1, Cin), ws,
                                     vmem_limit=vmem_limit)

    out = out2d.reshape(N, Ho, Wo, cexp_p)
    out = jnp.transpose(out, (0, 3, 1, 2))[:, :cexp]   # NHWC -> NCHW, drop channel pad
    return out.astype(jnp.float32)


# ------------------------------------------------------------------- reference --
def _conv_norm_ref(x, p, stride, relu):
    k = p['w'].shape[0]
    pad = (k - 1) // 2
    y = lax.conv_general_dilated(
        x, p['w'], (stride, stride), [(pad, pad), (pad, pad)],
        dimension_numbers=('NHWC', 'HWIO', 'NHWC'),
        precision=lax.Precision.HIGHEST)
    y = y * p['scale'] + p['bias']
    return jnp.maximum(y, 0.0) if relu else y


def bottleneck_ref(x_nchw, params, stride, shortcut, variant='b'):
    x = jnp.transpose(x_nchw, (0, 2, 3, 1)).astype(jnp.float32)
    s1, s2 = (stride, 1) if variant == 'a' else (1, stride)
    out = _conv_norm_ref(x, params['branch2a'], s1, True)
    out = _conv_norm_ref(out, params['branch2b'], s2, True)
    out = _conv_norm_ref(out, params['branch2c'], 1, False)
    if shortcut:
        short = x
    elif variant == 'd' and stride == 2:
        short = _conv_norm_ref(_avgpool2x2_ceil(x), params['short'], 1, False)
    else:
        short = _conv_norm_ref(x, params['short'], stride, False)
    out = jnp.maximum(out + short, 0.0)
    return jnp.transpose(out, (0, 3, 1, 2))


# ---------------------------------------------------------------------- params --
def make_convnorm_params(key, cin, cout, ksize):
    k1, k2, k3, k4, k5 = jax.random.split(key, 5)
    w = 0.1 * jax.random.normal(k1, (ksize, ksize, cin, cout), jnp.float32)  # HWIO
    gamma = 1.0 + 0.1 * jax.random.normal(k2, (cout,), jnp.float32)
    beta = 0.1 * jax.random.normal(k3, (cout,), jnp.float32)
    mean = 0.1 * jax.random.normal(k4, (cout,), jnp.float32)
    var = jax.random.uniform(k5, (cout,), jnp.float32, minval=0.5, maxval=1.5)
    scale = gamma / jnp.sqrt(var + _BN_EPS)       # folded eval-mode BatchNorm
    bias = beta - mean * scale
    return dict(w=w, scale=scale, bias=bias)


# ------------------------------------------------------------------------ main --
if __name__ == "__main__":
    key = jax.random.PRNGKey(0)
    keys = jax.random.split(key, 6)

    N, ch_in, H, W = 2, 8, 16, 16
    ch_out, stride, shortcut, variant, expansion = 4, 2, False, 'b', 4

    x = jax.random.normal(keys[0], (N, ch_in, H, W), jnp.float32)
    params = {
        'branch2a': make_convnorm_params(keys[1], ch_in, ch_out, 1),
        'branch2b': make_convnorm_params(keys[2], ch_out, ch_out, 3),
        'branch2c': make_convnorm_params(keys[3], ch_out, ch_out * expansion, 1),
        'short':    make_convnorm_params(keys[4], ch_in, ch_out * expansion, 1),
    }

    out = bottleneck_forward(x, params, stride, shortcut, variant)
    out = jax.block_until_ready(out)

    ref = bottleneck_ref(x, params, stride, shortcut, variant)
    np.testing.assert_allclose(np.asarray(out), np.asarray(ref), rtol=2e-2, atol=2e-2)
    assert out.shape == (N, ch_out * expansion, H // stride, W // stride)

    print("KERNEL_OK")
</pallas_src>

<mosaic_0001>
module attributes {stable_mosaic.version = 11 : i64} {
  func.func @_mm_bias_act_kernel(%arg0: i32, %arg1: i32, %arg2: memref<128x8xbf16, #tpu.memory_space<vmem>>, %arg3: memref<8x128xbf16, #tpu.memory_space<vmem>>, %arg4: memref<1x128xf32, #tpu.memory_space<vmem>>, %arg5: memref<128x128xbf16, #tpu.memory_space<vmem>>) attributes {dimension_semantics = [#tpu.dimension_semantics<parallel>, #tpu.dimension_semantics<parallel>], iteration_bounds = array<i64: 4, 1>, scalar_prefetch = 0 : i64, scratch_operands = 0 : i64, tpu.core_type = #tpu.core_type<tc>, window_params = [{transform_indices = @transform_0, window_bounds = array<i64: 128, 8>}, {transform_indices = @transform_1, window_bounds = array<i64: 8, 128>}, {transform_indices = @transform_2, window_bounds = array<i64: 1, 128>}, {transform_indices = @transform_3, window_bounds = array<i64: 128, 128>}]} {
    %c0 = arith.constant 0 : index
    %c0_0 = arith.constant 0 : index
    %0 = vector.load %arg2[%c0, %c0_0] : memref<128x8xbf16, #tpu.memory_space<vmem>>, vector<128x8xbf16>
    %c0_1 = arith.constant 0 : index
    %c0_2 = arith.constant 0 : index
    %1 = vector.load %arg3[%c0_1, %c0_2] : memref<8x128xbf16, #tpu.memory_space<vmem>>, vector<8x128xbf16>
    %cst = arith.constant dense<0.000000e+00> : vector<128x128xf32>
    %2 = tpu.matmul %0, %1, %cst {dimension_numbers = #tpu.dot_dimension_numbers<[1], [0], [0], [1], [0, 0, 1, 1], [], []>} : vector<128x8xbf16>, vector<8x128xbf16>, vector<128x128xf32> -> vector<128x128xf32>
    %c0_3 = arith.constant 0 : index
    %c0_4 = arith.constant 0 : index
    %3 = vector.load %arg4[%c0_3, %c0_4] : memref<1x128xf32, #tpu.memory_space<vmem>>, vector<1x128xf32>
    %4 = vector.broadcast %3 : vector<1x128xf32> to vector<128x128xf32>
    %5 = arith.addf %2, %4 : vector<128x128xf32>
    %cst_5 = arith.constant 0.000000e+00 : f32
    %6 = vector.broadcast %cst_5 : f32 to vector<128x128xf32>
    %7 = arith.maximumf %5, %6 : vector<128x128xf32>
    %8 = arith.truncf %7 : vector<128x128xf32> to vector<128x128xbf16>
    %c0_6 = arith.constant 0 : index
    %c0_7 = arith.constant 0 : index
    %9 = vector.load %arg5[%c0_6, %c0_7] : memref<128x128xbf16, #tpu.memory_space<vmem>>, vector<128x128xbf16>
    tpu.vector_store %arg5[%c0_6, %c0_7], %8 {strides = array<i32>} : memref<128x128xbf16, #tpu.memory_space<vmem>>, vector<128x128xbf16>,
    return
  }
  func.func @transform_0(%arg0: i32, %arg1: i32) -> (i32, i32) {
    %c0_i32 = arith.constant 0 : i32
    %c0_i32_0 = arith.constant 0 : i32
    return %arg0, %c0_i32 : i32, i32
  }
  func.func @transform_1(%arg0: i32, %arg1: i32) -> (i32, i32) {
    %c0_i32 = arith.constant 0 : i32
    %c0_i32_0 = arith.constant 0 : i32
    return %c0_i32, %arg1 : i32, i32
  }
  func.func @transform_2(%arg0: i32, %arg1: i32) -> (i32, i32) {
    %c0_i32 = arith.constant 0 : i32
    %c0_i32_0 = arith.constant 0 : i32
    return %c0_i32, %arg1 : i32, i32
  }
  func.func @transform_3(%arg0: i32, %arg1: i32) -> (i32, i32) {
    %c0_i32 = arith.constant 0 : i32
    return %arg0, %arg1 : i32, i32
  }
}

</mosaic_0001>

<llo_original>
// kernel: tpu_custom_call.1
$region0: #{tpu_custom_call.1}
  #allocation0 [shape = 'u32[]', space=smem, size = 0x4, offset = 0x4, fixed_abs, tag = 'smem constant byte address 0x4 - core index']
  #allocation1 [shape = 'u32[144,128]{1,0:T(1,128)}', space=vmem, size = 0x12000, scoped, tag = 'internal scratch']
  %s0 = inlined_call_operand.vmem [shape: bf16[512,8], index: 0, kind: input, shape index: {}]
  %s1 = inlined_call_operand.vmem [shape: bf16[8,128], index: 1, kind: input, shape index: {}]
  %s2 = inlined_call_operand.vmem [shape: f32[1,128], index: 2, kind: input, shape index: {}]
  %s3 = inlined_call_operand.hbm [shape: bf16[512,128], index: 3, kind: output, shape index: {}]
  %s4 = sld [smem:[#allocation0]]
  $region45: #{tpu_custom_call.1} parent=0
    _
  %s6 = ssub.s32 1, %s4
  %s7 = scalar_select 0, %s6, %s4
  $region1: #{tpu_custom_call.1} parent=0
    #allocation2 [shape = 'u8[65536]{0}', space=vmem, size = 0x10000, scoped, tag = 'output window, operand 0']
    #allocation3 [shape = 's32[2]{0}', space=sflag, size = 0x8, scoped, tag = 'scoped memory for tpu_custom_call.1']
    %8 = vsyncpa [#allocation3], 0
    %s9 = scalar_lea.sflag [#allocation3], 1
    %10 = vsyncpa %s9, 0
    loop: start=0, step=1, limit=6
    $region2: #{tpu_custom_call.1} parent=1 // loop_pre_header
      _
    $region3: #{tpu_custom_call.1} parent=1 // loop_header
      %s12 = sphi 0, %s16
      %p13 = scmp.ge.s32.totalorder %s12, 6
      %s19 = sphi 0, %s31
      %s20 = sphi 0, %s27
      %s21 = sphi 0, %s19
      %s22 = sphi 0, %s20
      %s23 = sphi 0, %s21
      %s24 = sphi 0, %s22
      %s34 = sphi 0, %s36
      %s37 = sphi 0, %s34
      %s38 = sphi 0, %s37
      %s54 = sphi 0, %s38
      %s60 = sphi 0, %s62
      %s63 = sphi 0, %s60
      %s64 = sphi 0, %s63
      %s80 = sphi 0, %s64
      %s86 = sphi 0, %s88
      %s89 = sphi 0, %s86
      %s90 = sphi 0, %s89
      %s106 = sphi 0, %s90
      %s114 = sphi 0, %s116
      %s117 = sphi 0, %s114
      %s118 = sphi 0, %s117
      %s134 = sphi 0, %s118
    $region4: #{tpu_custom_call.1} parent=1 // loop_header_branch
      %15 = sbr.rel (%p13) target = $region8
    $region5: #{tpu_custom_call.1} parent=1 // loop_body
      %s17 = ssub.s32 %s12, 1
      %s18 = ssub.s32 %s12, 2
      %s25 = sadd.s32 1, %s20
      %p26 = scmp.ge.s32.totalorder %s25, 1
      %s27 = scalar_select %p26, 0, %s25
      %s28 = sadd.s32 1, %s19
      %s29 = scalar_select %p26, %s28, %s19
      %p30 = scmp.ge.s32.totalorder %s29, 4
      %s31 = scalar_select %p30, 0, %s29
      %s32 = ssub.s32 %s19, %s31
      %p33 = scmp.eq.s32.totalorder %s32, 0
      %s35 = sadd.s32 %s34, 1
      %s36 = scalar_select %p33, %s34, %s35
      %p39 = pneg %p33
      %p40 = scmp.eq.s32.totalorder %s12, 3
      %p41 = por %p39, %p40
      %p42 = scmp.ne.s32.totalorder %s34, %s37
      %p43 = scmp.eq.s32.totalorder %s12, 0
      %p44 = por %p42, %p43
      %p45 = scmp.ne.s32.totalorder %s34, %s37
      %p46 = scmp.eq.s32.totalorder %s17, 3
      %p47 = por %p45, %p46
      %p48 = scmp.ne.s32.totalorder %s37, %s38
      %p49 = scmp.eq.s32.totalorder %s17, 0
      %p50 = por %p48, %p49
      %p51 = scmp.ne.s32.totalorder %s37, %s38
      %p52 = scmp.eq.s32.totalorder %s18, 3
      %p53 = por %p51, %p52
      %p55 = scmp.ne.s32.totalorder %s38, %s54
      %p56 = scmp.eq.s32.totalorder %s18, 0
      %p57 = por %p55, %p56
      %s58 = ssub.s32 %s20, %s27
      %p59 = scmp.eq.s32.totalorder %s58, 0
      %s61 = sadd.s32 %s60, 1
      %s62 = scalar_select %p59, %s60, %s61
      %p65 = pneg %p59
      %p66 = scmp.eq.s32.totalorder %s12, 3
      %p67 = por %p65, %p66
      %p68 = scmp.ne.s32.totalorder %s60, %s63
      %p69 = scmp.eq.s32.totalorder %s12, 0
      %p70 = por %p68, %p69
      %p71 = scmp.ne.s32.totalorder %s60, %s63
      %p72 = scmp.eq.s32.totalorder %s17, 3
      %p73 = por %p71, %p72
      %p74 = scmp.ne.s32.totalorder %s63, %s64
      %p75 = scmp.eq.s32.totalorder %s17, 0
      %p76 = por %p74, %p75
      %p77 = scmp.ne.s32.totalorder %s63, %s64
      %p78 = scmp.eq.s32.totalorder %s18, 3
      %p79 = por %p77, %p78
      %p81 = scmp.ne.s32.totalorder %s64, %s80
      %p82 = scmp.eq.s32.totalorder %s18, 0
      %p83 = por %p81, %p82
      %s84 = ssub.s32 %s20, %s27
      %p85 = scmp.eq.s32.totalorder %s84, 0
      %s87 = sadd.s32 %s86, 1
      %s88 = scalar_select %p85, %s86, %s87
      %p91 = pneg %p85
      %p92 = scmp.eq.s32.totalorder %s12, 3
      %p93 = por %p91, %p92
      %p94 = scmp.ne.s32.totalorder %s86, %s89
      %p95 = scmp.eq.s32.totalorder %s12, 0
      %p96 = por %p94, %p95
      %p97 = scmp.ne.s32.totalorder %s86, %s89
      %p98 = scmp.eq.s32.totalorder %s17, 3
      %p99 = por %p97, %p98
      %p100 = scmp.ne.s32.totalorder %s89, %s90
      %p101 = scmp.eq.s32.totalorder %s17, 0
      %p102 = por %p100, %p101
      %p103 = scmp.ne.s32.totalorder %s89, %s90
      %p104 = scmp.eq.s32.totalorder %s18, 3
      %p105 = por %p103, %p104
      %p107 = scmp.ne.s32.totalorder %s90, %s106
      %p108 = scmp.eq.s32.totalorder %s18, 0
      %p109 = por %p107, %p108
      %s110 = ssub.s32 %s19, %s31
      %s111 = ssub.s32 %s20, %s27
      %s112 = sor.u32 %s110, %s111
      %p113 = scmp.eq.s32.totalorder %s112, 0
      %s115 = sadd.s32 %s114, 1
      %s116 = scalar_select %p113, %s114, %s115
      %p119 = pneg %p113
      %p120 = scmp.eq.s32.totalorder %s12, 3
      %p121 = por %p119, %p120
      %p122 = scmp.ne.s32.totalorder %s114, %s117
      %p123 = scmp.eq.s32.totalorder %s12, 0
      %p124 = por %p122, %p123
      %p125 = scmp.ne.s32.totalorder %s114, %s117
      %p126 = scmp.eq.s32.totalorder %s17, 3
      %p127 = por %p125, %p126
      %p128 = scmp.ne.s32.totalorder %s117, %s118
      %p129 = scmp.eq.s32.totalorder %s17, 0
      %p130 = por %p128, %p129
      %p131 = scmp.ne.s32.totalorder %s117, %s118
      %p132 = scmp.eq.s32.totalorder %s18, 3
      %p133 = por %p131, %p132
      %p135 = scmp.ne.s32.totalorder %s118, %s134
      %p136 = scmp.eq.s32.totalorder %s18, 0
      %p137 = por %p135, %p136
      %p138 = scmp.le.s32.totalorder 1, %s12
      %p139 = scmp.lt.s32.totalorder %s12, 5
      %p140 = pnand %p138, %p139
      %p141 = pneg %p140
      // Predicated region
      $region9: #{tpu_custom_call.1} parent=5 // pred_check
        _
      $region10: #{tpu_custom_call.1} parent=5 // pred_check_branch
        %143 = sbr.rel (%p140) target = $region12
      $region11: #{tpu_custom_call.1} parent=5 // pred_region
        %s144 = ssub.s32 %s12, 1
        // Predicated region
        $region13: #{tpu_custom_call.1} parent=11 // pred_check
          %p145 = pneg %p76
        $region14: #{tpu_custom_call.1} parent=11 // pred_check_branch
          %147 = sbr.rel (%p145) target = $region16
        $region15: #{tpu_custom_call.1} parent=11 // pred_region
          %p148 = scmp.lt.s32.totalorder %s22, 0
          %s149 = scalar_select %p148, %s22, 0
          %s150 = smul.addr %s149, 4
          %s151 = scalar_lea.vmem %s1, %s150
        $region16: #{tpu_custom_call.1} parent=11 // pred_fallthru
          _
        // Predicated region
        $region17: #{tpu_custom_call.1} parent=11 // pred_check
          %p152 = pneg %p102
        $region18: #{tpu_custom_call.1} parent=11 // pred_check_branch
          %154 = sbr.rel (%p152) target = $region20
        $region19: #{tpu_custom_call.1} parent=11 // pred_region
          %p155 = scmp.lt.s32.totalorder %s22, 0
          %s156 = scalar_select %p155, %s22, 0
          %s157 = scalar_lea.vmem %s2, %s156
        $region20: #{tpu_custom_call.1} parent=11 // pred_fallthru
          _
      $region12: #{tpu_custom_call.1} parent=5 // pred_fallthru
        _
      %p158 = scmp.lt.s32.totalorder %s12, 4
      // Predicated region
      $region21: #{tpu_custom_call.1} parent=5 // pred_check
        %p159 = pneg %p158
      $region22: #{tpu_custom_call.1} parent=5 // pred_check_branch
        %161 = sbr.rel (%p159) target = $region24
      $region23: #{tpu_custom_call.1} parent=5 // pred_region
        // Predicated region
        $region25: #{tpu_custom_call.1} parent=23 // pred_check
          %p162 = pneg %p44
        $region26: #{tpu_custom_call.1} parent=23 // pred_check_branch
          %164 = sbr.rel (%p162) target = $region28
        $region27: #{tpu_custom_call.1} parent=23 // pred_region
          %s165 = smul.u32 16, %s19
          %p166 = scmp.lt.s32.totalorder %s165, 63
          %s167 = scalar_select %p166, %s165, 63
          %s168 = smul.addr %s167, 4
          %s169 = scalar_lea.vmem %s0, %s168
          %s170 = smul.u32 16, %s19
        $region28: #{tpu_custom_call.1} parent=23 // pred_fallthru
          _
      $region24: #{tpu_custom_call.1} parent=5 // pred_fallthru
        _
      %p171 = scmp.le.s32.totalorder 1, %s12
      %p172 = scmp.lt.s32.totalorder %s12, 5
      %p173 = pnand %p171, %p172
      %p174 = pneg %p173
      // Predicated region
      $region29: #{tpu_custom_call.1} parent=5 // pred_check
        _
      $region30: #{tpu_custom_call.1} parent=5 // pred_check_branch
        %176 = sbr.rel (%p173) target = $region32
      $region31: #{tpu_custom_call.1} parent=5 // pred_region
        %s177 = ssub.s32 %s12, 1
        %s178 = smul.u32 16, %s21
        %p179 = scmp.lt.s32.totalorder %s178, 63
        %s180 = scalar_select %p179, %s178, 63
        %s181 = smul.addr %s180, 4
        %s182 = scalar_lea.vmem %s0, %s181
        %p183 = pneg %p50
        %p184 = pneg %p47
        %p185 = scmp.lt.s32.totalorder %s22, 0
        %s186 = scalar_select %p185, %s22, 0
        %s187 = smul.addr %s186, 4
        %s188 = scalar_lea.vmem %s1, %s187
        %p189 = pneg %p76
        %p190 = pneg %p73
        %p191 = scmp.lt.s32.totalorder %s22, 0
        %s192 = scalar_select %p191, %s22, 0
        %s193 = scalar_lea.vmem %s2, %s192
        %p194 = pneg %p102
        %p195 = pneg %p99
        %p196 = pneg %p130
        %p197 = pneg %p127
        %s198 = sand.u32 %s117, 1
        %s199 = scalar_lea.sflag [#allocation3], %s198
        %s200 = sand.u32 %s117, 1
        %s201 = smul.addr %s200, 64
        %s202 = scalar_lea.vmem [#allocation2], %s201
        %s203 = smul.u32 16, %s21
        %p204 = scmp.lt.s32.totalorder %s203, 63
        %s205 = scalar_select %p204, %s203, 63
        %s206 = smul.addr %s205, 4
        %s207 = scalar_lea.vmem %s0, %s206
        %s208 = smul.u32 16, %s21
        %p209 = scmp.lt.s32.totalorder %s22, 0
        %s210 = scalar_select %p209, %s22, 0
        %s211 = smul.addr %s210, 4
        %s212 = scalar_lea.vmem %s1, %s211
        %p213 = scmp.lt.s32.totalorder %s22, 0
        %s214 = scalar_select %p213, %s22, 0
        %s215 = scalar_lea.vmem %s2, %s214
        %s216 = smul.u32 16, %s21
        %v218 = vld [vmem:[%s207] sm:$0xf]
        %v219 = vld [vmem:[%s207 + $0x4] sm:$0xf]
        %v220 = vld [vmem:[%s207 + $0x8] sm:$0xf]
        %v221 = vld [vmem:[%s207 + $0xc] sm:$0xf]
        %v222 = vld [vmem:[%s207 + $0x10] sm:$0xf]
        %v223 = vld [vmem:[%s207 + $0x14] sm:$0xf]
        %v224 = vld [vmem:[%s207 + $0x18] sm:$0xf]
        %v225 = vld [vmem:[%s207 + $0x1c] sm:$0xf]
        %v226 = vld [vmem:[%s207 + $0x20] sm:$0xf]
        %v227 = vld [vmem:[%s207 + $0x24] sm:$0xf]
        %v228 = vld [vmem:[%s207 + $0x28] sm:$0xf]
        %v229 = vld [vmem:[%s207 + $0x2c] sm:$0xf]
        %v230 = vld [vmem:[%s207 + $0x30] sm:$0xf]
        %v231 = vld [vmem:[%s207 + $0x34] sm:$0xf]
        %v232 = vld [vmem:[%s207 + $0x38] sm:$0xf]
        %v233 = vld [vmem:[%s207 + $0x3c] sm:$0xf]
        %v234 = vld [vmem:[%s212] sm:$0xf]
        %v235 = vld [vmem:[%s215] sm:$0x1]
        %v237 = vlaneseq
        %v238 = vshrl.u32 %v237, 7
        %v239 = vsub.s32 0, %v238
        %v240 = vrot.slane %v235, %v239
        %v258 = vunpack.c.l.b16 %v218
        %v259 = vunpack.c.l.b16 %v219
        %v260 = vunpack.c.l.b16 %v220
        %v261 = vunpack.c.l.b16 %v221
        %v262 = vunpack.c.l.b16 %v222
        %v263 = vunpack.c.l.b16 %v223
        %v264 = vunpack.c.l.b16 %v224
        %v265 = vunpack.c.l.b16 %v225
        %v266 = vunpack.c.l.b16 %v226
        %v267 = vunpack.c.l.b16 %v227
        %v268 = vunpack.c.l.b16 %v228
        %v269 = vunpack.c.l.b16 %v229
        %v270 = vunpack.c.l.b16 %v230
        %v271 = vunpack.c.l.b16 %v231
        %v272 = vunpack.c.l.b16 %v232
        %v273 = vunpack.c.l.b16 %v233
        %v274 = vpack.c.b16 %v259, %v258
        %v275 = vpack.c.b16 %v261, %v260
        %v276 = vpack.c.b16 %v263, %v262
        %v277 = vpack.c.b16 %v265, %v264
        %v278 = vpack.c.b16 %v267, %v266
        %v279 = vpack.c.b16 %v269, %v268
        %v280 = vpack.c.b16 %v271, %v270
        %v281 = vpack.c.b16 %v273, %v272
        %vm282 = vcmask 64512
        %v284 = vsel %vm282, %v274, 0
        %v287 = vsel %vm282, %v275, 0
        %v290 = vsel %vm282, %v276, 0
        %v293 = vsel %vm282, %v277, 0
        %v296 = vsel %vm282, %v278, 0
        %v299 = vsel %vm282, %v279, 0
        %v302 = vsel %vm282, %v280, 0
        %v305 = vsel %vm282, %v281, 0
        %vm307 = vcmask 1043456
        %v309 = vsel %vm307, %v234, 0
        %311 = vmatprep.subr.bf16.mxu0 0
        %312 = vmatpush1.bf16.msra.mxu0 0
        %313 = vmatprep.subr.bf16.mxu0 0
        %314 = vmatpush1.bf16.msra.mxu0 0
        %315 = vmatprep.subr.bf16.mxu0 0
        %316 = vmatpush1.bf16.msra.mxu0 0
        %317 = vmatprep.subr.bf16.mxu0 0
        %318 = vmatpush1.bf16.msra.mxu0 0
        %319 = vmatprep.subr.bf16.mxu0 0
        %320 = vmatpush1.bf16.msra.mxu0 0
        %321 = vmatprep.subr.bf16.mxu0 0
        %322 = vmatpush1.bf16.msra.mxu0 0
        %323 = vmatprep.subr.bf16.mxu0 0
        %324 = vmatpush1.bf16.msra.mxu0 0
        %325 = vmatprep.subr.bf16.mxu0 0
        %326 = vmatpush1.bf16.msra.mxu0 %v309
        %327 = vmatprep.subr.bf16.mxu0 0
        %328 = vmatpush2.bf16.msra.mxu0 0
        %329 = vmatprep.subr.bf16.mxu0 0
        %330 = vmatpush2.bf16.msra.mxu0 0
        %331 = vmatprep.subr.bf16.mxu0 0
        %332 = vmatpush2.bf16.msra.mxu0 0
        %333 = vmatprep.subr.bf16.mxu0 0
        %334 = vmatpush2.bf16.msra.mxu0 0
        %335 = vmatprep.subr.bf16.mxu0 0
        %336 = vmatpush2.bf16.msra.mxu0 0
        %337 = vmatprep.subr.bf16.mxu0 0
        %338 = vmatpush2.bf16.msra.mxu0 0
        %339 = vmatprep.subr.bf16.mxu0 0
        %340 = vmatpush2.bf16.msra.mxu0 0
        %341 = vmatprep.subr.bf16.mxu0 0
        %342 = vmatpush2.bf16.msra.mxu0 0
        %343 = vmatprep.mubr.bf16.mxu0 0
        %344 = vmatmul.mubr.bf16.gmra.mxu0 %v284
        %v345 = vpop.f32.mrf.mxu0
        %v346 = vadd.f32 %v240, %v345
        %v347 = vpop.f32.mrf.mxu0
        %v348 = vpop.f32.mrf.mxu0
        %v349 = vadd.f32 %v240, %v348
        %v350 = vpop.f32.mrf.mxu0
        %351 = vmatprep.mubr.bf16.mxu0 0
        %352 = vmatmul.mubr.bf16.gmra.mxu0 %v287
        %v353 = vpop.f32.mrf.mxu0
        %v354 = vadd.f32 %v240, %v353
        %v355 = vpop.f32.mrf.mxu0
        %v356 = vpop.f32.mrf.mxu0
        %v357 = vadd.f32 %v240, %v356
        %v358 = vpop.f32.mrf.mxu0
        %359 = vmatprep.mubr.bf16.mxu0 0
        %360 = vmatmul.mubr.bf16.gmra.mxu0 %v290
        %v361 = vpop.f32.mrf.mxu0
        %v362 = vadd.f32 %v240, %v361
        %v363 = vpop.f32.mrf.mxu0
        %v364 = vpop.f32.mrf.mxu0
        %v365 = vadd.f32 %v240, %v364
        %v366 = vpop.f32.mrf.mxu0
        %367 = vmatprep.mubr.bf16.mxu0 0
        %368 = vmatmul.mubr.bf16.gmra.mxu0 %v293
        %v369 = vpop.f32.mrf.mxu0
        %v370 = vadd.f32 %v240, %v369
        %v371 = vpop.f32.mrf.mxu0
        %v372 = vpop.f32.mrf.mxu0
        %v373 = vadd.f32 %v240, %v372
        %v374 = vpop.f32.mrf.mxu0
        %375 = vmatprep.mubr.bf16.mxu0 0
        %376 = vmatmul.mubr.bf16.gmra.mxu0 %v296
        %v377 = vpop.f32.mrf.mxu0
        %v378 = vadd.f32 %v240, %v377
        %v379 = vpop.f32.mrf.mxu0
        %v380 = vpop.f32.mrf.mxu0
        %v381 = vadd.f32 %v240, %v380
        %v382 = vpop.f32.mrf.mxu0
        %383 = vmatprep.mubr.bf16.mxu0 0
        %384 = vmatmul.mubr.bf16.gmra.mxu0 %v299
        %v385 = vpop.f32.mrf.mxu0
        %v386 = vadd.f32 %v240, %v385
        %v387 = vpop.f32.mrf.mxu0
        %v388 = vpop.f32.mrf.mxu0
        %v389 = vadd.f32 %v240, %v388
        %v390 = vpop.f32.mrf.mxu0
        %391 = vmatprep.mubr.bf16.mxu0 0
        %392 = vmatmul.mubr.bf16.gmra.mxu0 %v302
        %v393 = vpop.f32.mrf.mxu0
        %v394 = vadd.f32 %v240, %v393
        %v395 = vpop.f32.mrf.mxu0
        %v396 = vpop.f32.mrf.mxu0
        %v397 = vadd.f32 %v240, %v396
        %v398 = vpop.f32.mrf.mxu0
        %399 = vmatprep.mubr.bf16.mxu0 0
        %400 = vmatmul.mubr.bf16.gmra.mxu0 %v305
        %v401 = vpop.f32.mrf.mxu0
        %v402 = vadd.f32 %v240, %v401
        %v403 = vpop.f32.mrf.mxu0
        %v404 = vpop.f32.mrf.mxu0
        %v405 = vadd.f32 %v240, %v404
        %v406 = vpop.f32.mrf.mxu0
        %407 = vdwg.mxu0
        %v408 = vmax.f32 %v346, 0.0
        %v409 = vmax.f32 %v349, 0.0
        %v410 = vmax.f32 %v354, 0.0
        %v411 = vmax.f32 %v357, 0.0
        %v412 = vmax.f32 %v362, 0.0
        %v413 = vmax.f32 %v365, 0.0
        %v414 = vmax.f32 %v370, 0.0
        %v415 = vmax.f32 %v373, 0.0
        %v416 = vmax.f32 %v378, 0.0
        %v417 = vmax.f32 %v381, 0.0
        %v418 = vmax.f32 %v386, 0.0
        %v419 = vmax.f32 %v389, 0.0
        %v420 = vmax.f32 %v394, 0.0
        %v421 = vmax.f32 %v397, 0.0
        %v422 = vmax.f32 %v402, 0.0
        %v423 = vmax.f32 %v405, 0.0
        %v424 = vpack.c.bf16 %v409, %v408
        %v425 = vpack.c.bf16 %v411, %v410
        %v426 = vpack.c.bf16 %v413, %v412
        %v427 = vpack.c.bf16 %v415, %v414
        %v428 = vpack.c.bf16 %v417, %v416
        %v429 = vpack.c.bf16 %v419, %v418
        %v430 = vpack.c.bf16 %v421, %v420
        %v431 = vpack.c.bf16 %v423, %v422
        %v440 = vunpack.c.l.b16 %v424
        %v441 = vunpack.c.h.b16 %v424
        %v442 = vunpack.c.l.b16 %v425
        %v443 = vunpack.c.h.b16 %v425
        %v444 = vunpack.c.l.b16 %v426
        %v445 = vunpack.c.h.b16 %v426
        %v446 = vunpack.c.l.b16 %v427
        %v447 = vunpack.c.h.b16 %v427
        %v448 = vunpack.c.l.b16 %v428
        %v449 = vunpack.c.h.b16 %v428
        %v450 = vunpack.c.l.b16 %v429
        %v451 = vunpack.c.h.b16 %v429
        %v452 = vunpack.c.l.b16 %v430
        %v453 = vunpack.c.h.b16 %v430
        %v454 = vunpack.c.l.b16 %v431
        %v455 = vunpack.c.h.b16 %v431
        %v456 = vpack.c.b16 %v440, %v440
        %v457 = vpack.c.b16 %v441, %v441
        %v458 = vpack.c.b16 %v442, %v442
        %v459 = vpack.c.b16 %v443, %v443
        %v460 = vpack.c.b16 %v444, %v444
        %v461 = vpack.c.b16 %v445, %v445
        %v462 = vpack.c.b16 %v446, %v446
        %v463 = vpack.c.b16 %v447, %v447
        %v464 = vpack.c.b16 %v448, %v448
        %v465 = vpack.c.b16 %v449, %v449
        %v466 = vpack.c.b16 %v450, %v450
        %v467 = vpack.c.b16 %v451, %v451
        %v468 = vpack.c.b16 %v452, %v452
        %v469 = vpack.c.b16 %v453, %v453
        %v470 = vpack.c.b16 %v454, %v454
        %v471 = vpack.c.b16 %v455, %v455
        %488 = vst [vmem:[%s202] sm:$0xf] %v456
        %489 = vst [vmem:[%s202 + $0x4] sm:$0xf] %v457
        %490 = vst [vmem:[%s202 + $0x8] sm:$0xf] %v458
        %491 = vst [vmem:[%s202 + $0xc] sm:$0xf] %v459
        %492 = vst [vmem:[%s202 + $0x10] sm:$0xf] %v460
        %493 = vst [vmem:[%s202 + $0x14] sm:$0xf] %v461
        %494 = vst [vmem:[%s202 + $0x18] sm:$0xf] %v462
        %495 = vst [vmem:[%s202 + $0x1c] sm:$0xf] %v463
        %496 = vst [vmem:[%s202 + $0x20] sm:$0xf] %v464
        %497 = vst [vmem:[%s202 + $0x24] sm:$0xf] %v465
        %498 = vst [vmem:[%s202 + $0x28] sm:$0xf] %v466
        %499 = vst [vmem:[%s202 + $0x2c] sm:$0xf] %v467
        %500 = vst [vmem:[%s202 + $0x30] sm:$0xf] %v468
        %501 = vst [vmem:[%s202 + $0x34] sm:$0xf] %v469
        %502 = vst [vmem:[%s202 + $0x38] sm:$0xf] %v470
        %503 = vst [vmem:[%s202 + $0x3c] sm:$0xf] %v471
        %s504 = sand.u32 %s117, 1
        %s505 = scalar_lea.sflag [#allocation3], %s504
        %s506 = sand.u32 %s117, 1
        %s507 = smul.addr %s506, 64
        %s508 = scalar_lea.vmem [#allocation2], %s507
        // Predicated region
        $region33: #{tpu_custom_call.1} parent=31 // pred_check
          %p509 = pneg %p127
        $region34: #{tpu_custom_call.1} parent=31 // pred_check_branch
          %511 = sbr.rel (%p509) target = $region36
        $region35: #{tpu_custom_call.1} parent=31 // pred_region
          %s512 = smul.u32 16, %s21
          %s514 = ssub.s32 1024, 1024
          %515 = vsyncadd %s505, %s514
          %s516 = sadd.s32 %s22, %s512
          %s517 = smul.addr %s516, 64
          %s518 = scalar_lea.hbm %s3, %s517
          %s519 = sshll.u32 %s508, 4
          %s520 = int_to_ptr.vmem [resolvable:$true] %s519
          %525 = dma.vmem_to_hbm [thread:$0]  %s520, 1024, %s518, %s505, 64, 64, 4
        $region36: #{tpu_custom_call.1} parent=31 // pred_fallthru
          _
      $region32: #{tpu_custom_call.1} parent=5 // pred_fallthru
        _
      %p526 = scmp.le.s32.totalorder 2, %s12
      // Predicated region
      $region37: #{tpu_custom_call.1} parent=5 // pred_check
        %p527 = pneg %p526
      $region38: #{tpu_custom_call.1} parent=5 // pred_check_branch
        %529 = sbr.rel (%p527) target = $region40
      $region39: #{tpu_custom_call.1} parent=5 // pred_region
        %s530 = ssub.s32 %s12, 2
        // Predicated region
        $region41: #{tpu_custom_call.1} parent=39 // pred_check
          %p531 = pneg %p133
        $region42: #{tpu_custom_call.1} parent=39 // pred_check_branch
          %533 = sbr.rel (%p531) target = $region44
        $region43: #{tpu_custom_call.1} parent=39 // pred_region
          %s534 = sand.u32 %s118, 1
          %s535 = scalar_lea.sflag [#allocation3], %s534
          %s536 = sand.u32 %s118, 1
          %s537 = smul.addr %s536, 64
          %s538 = scalar_lea.vmem [#allocation2], %s537
          %539 = dma.done %s535, 1024
        $region44: #{tpu_custom_call.1} parent=39 // pred_fallthru
          _
      $region40: #{tpu_custom_call.1} parent=5 // pred_fallthru
        _
    $region6: #{tpu_custom_call.1} parent=1 // loop_footer
      %s16 = sadd.s32 1, %s12
    $region7: #{tpu_custom_call.1} parent=1 // loop_footer_branch
      %11 = sbr.rel target = $region3
    $region8: #{tpu_custom_call.1} parent=1 // loop_exit
      _
    %540 = vsyncpa [#allocation3], 1
    %s541 = scalar_lea.sflag [#allocation3], 1
    %542 = vsyncpa %s541, 1

</llo_original>
